<compile_context>
chip_gen: v7x
topology: tpu7x:2x2x1
jax: 0.10.0
libtpu: 0.0.40
codegen_flags: <defaults>
</compile_context>

<pallas_src>
import functools

import jax
import jax.numpy as jnp
from jax.experimental import pallas as pl
from jax.experimental.pallas import tpu as pltpu


def gau_kernel(x_ref, ln_g_ref, ln_b_ref,
               w_v_ref, b_v_ref, w_g_ref, b_g_ref,
               w_qk_ref, b_qk_ref,
               gq_ref, bq_ref, gk_ref, bk_ref,
               w_out_ref, b_out_ref,
               o_ref, *, tb, n):
    x = x_ref[...].astype(jnp.float32)                      # (TB*N, D)

    # ---- LayerNorm (eps matches torch default 1e-5), f32 ----
    mean = jnp.mean(x, axis=-1, keepdims=True)
    var = jnp.mean((x - mean) ** 2, axis=-1, keepdims=True)
    normed = (x - mean) * jax.lax.rsqrt(var + 1e-5)
    normed = normed * ln_g_ref[...] + ln_b_ref[...]         # (TB*N, D)
    normed_bf = normed.astype(jnp.bfloat16)                 # MXU operand

    def silu(t):                                            # f32 elementwise
        return t * jax.nn.sigmoid(t)

    # ---- to_hidden: split into v / gate halves (lane-aligned), SiLU ----
    v = silu(jnp.dot(normed_bf, w_v_ref[...],
                     preferred_element_type=jnp.float32) + b_v_ref[...])
    gate = silu(jnp.dot(normed_bf, w_g_ref[...],
                        preferred_element_type=jnp.float32) + b_g_ref[...])

    # ---- to_qk: Linear + SiLU ----
    z = silu(jnp.dot(normed_bf, w_qk_ref[...],
                     preferred_element_type=jnp.float32) + b_qk_ref[...])

    # ---- per-head affine; fold 1/seq_len into q ----
    inv_n = jnp.float32(1.0 / n)
    q = ((z * gq_ref[...] + bq_ref[...]) * inv_n).astype(jnp.bfloat16)
    k = (z * gk_ref[...] + bk_ref[...]).astype(jnp.bfloat16)

    qk_dim = q.shape[-1]
    h = v.shape[-1]
    q3 = q.reshape(tb, n, qk_dim)
    k3 = k.reshape(tb, n, qk_dim)
    v3 = v.astype(jnp.bfloat16).reshape(tb, n, h)

    # ---- attention: relu(q k^T)^2 (1/n already folded), per sample ----
    sim = jnp.einsum('bqd,bkd->bqk', q3, k3,
                     preferred_element_type=jnp.float32)    # (TB, N, N)
    a = jnp.maximum(sim, 0.0)
    a = (a * a).astype(jnp.bfloat16)
    av = jnp.einsum('bij,bjd->bid', a, v3,
                    preferred_element_type=jnp.float32)     # (TB, N, H)

    # ---- gate, to_out, residual ----
    vg = (av.reshape(tb * n, h) * gate).astype(jnp.bfloat16)
    out = jnp.dot(vg, w_out_ref[...],
                  preferred_element_type=jnp.float32) + b_out_ref[...]
    o_ref[...] = (out + x).astype(o_ref.dtype)


def _pick_block_batch(B, N, target_rows=256):
    """Largest divisor of B with roughly target_rows rows per grid step."""
    tb = max(1, min(B, target_rows // max(N, 1)))
    while B % tb:
        tb -= 1
    return tb


def gau_forward(x, params, *, block_batch=None):
    B, N, D = x.shape
    (ln_g, ln_b, w_hid, b_hid, w_qk, b_qk, gamma, beta, w_out, b_out) = params
    H = w_hid.shape[1] // 2
    QK = w_qk.shape[1]

    TB = _pick_block_batch(B, N) if block_batch is None else block_batch
    assert B % TB == 0
    grid = (B // TB,)
    rows = TB * N

    bf16 = jnp.bfloat16
    # Split packed to_hidden weight into lane-aligned v / gate halves; weights
    # go to HBM/VMEM as bf16 (MXU operands), biases stay f32.
    w_v = w_hid[:, :H].astype(bf16)
    w_g = w_hid[:, H:].astype(bf16)
    b_v = b_hid[:, :H]
    b_g = b_hid[:, H:]
    w_qk_bf = w_qk.astype(bf16)
    w_out_bf = w_out.astype(bf16)
    gq, gk = gamma[0:1, :], gamma[1:2, :]
    bq, bk = beta[0:1, :], beta[1:2, :]

    x2 = x.reshape(B * N, D)

    full = lambda shp: pl.BlockSpec(shp, lambda bi: tuple(0 for _ in shp))

    out2 = pl.pallas_call(
        functools.partial(gau_kernel, tb=TB, n=N),
        out_shape=jax.ShapeDtypeStruct((B * N, D), x.dtype),
        grid=grid,
        in_specs=[
            pl.BlockSpec((rows, D), lambda bi: (bi, 0)),   # x (fused rows)
            full((1, D)),                                  # ln gamma
            full((1, D)),                                  # ln beta
            full((D, H)),                                  # W_v
            full((1, H)),                                  # b_v
            full((D, H)),                                  # W_gate
            full((1, H)),                                  # b_gate
            full((D, QK)),                                 # W_qk
            full((1, QK)),                                 # b_qk
            full((1, QK)),                                 # gamma_q
            full((1, QK)),                                 # beta_q
            full((1, QK)),                                 # gamma_k
            full((1, QK)),                                 # beta_k
            full((H, D)),                                  # W_out
            full((1, D)),                                  # b_out
        ],
        out_specs=pl.BlockSpec((rows, D), lambda bi: (bi, 0)),
        compiler_params=pltpu.CompilerParams(
            dimension_semantics=("parallel",)),
    )(x2, ln_g, ln_b, w_v, b_v, w_g, b_g, w_qk_bf, b_qk,
      gq, bq, gk, bk, w_out_bf, b_out)
    return out2.reshape(B, N, D)


def gau_reference(x, params):
    """Plain-JAX f32 reference mirroring the PyTorch forward exactly."""
    (ln_g, ln_b, w_hid, b_hid, w_qk, b_qk, gamma, beta, w_out, b_out) = params
    n = x.shape[-2]
    mean = jnp.mean(x, axis=-1, keepdims=True)
    var = jnp.mean((x - mean) ** 2, axis=-1, keepdims=True)
    normed = (x - mean) * jax.lax.rsqrt(var + 1e-5) * ln_g[0] + ln_b[0]
    hid = normed @ w_hid + b_hid[0]
    hid = hid * jax.nn.sigmoid(hid)
    v, gate = jnp.split(hid, 2, axis=-1)
    z = normed @ w_qk + b_qk[0]
    z = z * jax.nn.sigmoid(z)
    qk = z[..., None, :] * gamma + beta                     # (..., 2, QK)
    q, k = qk[..., 0, :], qk[..., 1, :]
    sim = jnp.einsum('bid,bjd->bij', q, k) / n
    a = jnp.maximum(sim, 0.0) ** 2
    V = jnp.einsum('bij,bjd->bid', a, v) * gate
    return V @ w_out + b_out[0] + x


def init_params(key, dim, query_key_dim, hidden_dim, dtype=jnp.float32):
    # Weights stored (in, out): Linear(x) = x @ W + b.  Init scales are a bit
    # larger than the module defaults so the attention path contributes
    # measurably to the output (more meaningful numerical check).
    ks = jax.random.split(key, 8)
    ln_g = jnp.ones((1, dim), dtype)
    ln_b = jnp.zeros((1, dim), dtype)
    w_hid = 0.2 * jax.random.normal(ks[0], (dim, hidden_dim * 2), dtype)
    b_hid = 0.1 * jax.random.normal(ks[1], (1, hidden_dim * 2), dtype)
    w_qk = 0.2 * jax.random.normal(ks[2], (dim, query_key_dim), dtype)
    b_qk = 0.1 * jax.random.normal(ks[3], (1, query_key_dim), dtype)
    gamma = 0.5 * jax.random.normal(ks[4], (2, query_key_dim), dtype)
    beta = 0.1 * jax.random.normal(ks[5], (2, query_key_dim), dtype)
    w_out = 0.2 * jax.random.normal(ks[6], (hidden_dim, dim), dtype)
    b_out = 0.1 * jax.random.normal(ks[7], (1, dim), dtype)
    return (ln_g, ln_b, w_hid, b_hid, w_qk, b_qk, gamma, beta, w_out, b_out)


if __name__ == "__main__":
    key = jax.random.PRNGKey(0)
    B, N, D = 2, 16, 32            # batch, seq_len, dim
    QK = 128                       # query_key_dim (module default)
    H = int(2.0 * D)               # hidden_dim = expansion_factor * dim

    kx, kp = jax.random.split(key)
    x = jax.random.normal(kx, (B, N, D), jnp.float32)
    params = init_params(kp, D, QK, H)

    out = gau_forward(x, params)
    out = jax.block_until_ready(out)

    ref = gau_reference(x, params)
    assert out.shape == (B, N, D)
    # bf16 MXU operands with f32 accumulation -> loosened tolerance vs f32 ref.
    assert jnp.allclose(out, ref, atol=2e-2, rtol=2e-2), "mismatch vs reference"
    print("KERNEL_OK")
</pallas_src>

<mosaic_0001>
module attributes {stable_mosaic.version = 11 : i64} {
  func.func @gau_kernel(%arg0: i32, %arg1: memref<32x32xf32, #tpu.memory_space<vmem>>, %arg2: memref<1x32xf32, #tpu.memory_space<vmem>>, %arg3: memref<1x32xf32, #tpu.memory_space<vmem>>, %arg4: memref<32x64xbf16, #tpu.memory_space<vmem>>, %arg5: memref<1x64xf32, #tpu.memory_space<vmem>>, %arg6: memref<32x64xbf16, #tpu.memory_space<vmem>>, %arg7: memref<1x64xf32, #tpu.memory_space<vmem>>, %arg8: memref<32x128xbf16, #tpu.memory_space<vmem>>, %arg9: memref<1x128xf32, #tpu.memory_space<vmem>>, %arg10: memref<1x128xf32, #tpu.memory_space<vmem>>, %arg11: memref<1x128xf32, #tpu.memory_space<vmem>>, %arg12: memref<1x128xf32, #tpu.memory_space<vmem>>, %arg13: memref<1x128xf32, #tpu.memory_space<vmem>>, %arg14: memref<64x32xbf16, #tpu.memory_space<vmem>>, %arg15: memref<1x32xf32, #tpu.memory_space<vmem>>, %arg16: memref<32x32xf32, #tpu.memory_space<vmem>>) attributes {dimension_semantics = [#tpu.dimension_semantics<parallel>], iteration_bounds = array<i64: 1>, scalar_prefetch = 0 : i64, scratch_operands = 0 : i64, tpu.core_type = #tpu.core_type<tc>, window_params = [{transform_indices = @transform_0, window_bounds = array<i64: 32, 32>}, {pipeline_mode = #tpu.pipeline_mode<synchronous>, transform_indices = @transform_1, window_bounds = array<i64: 1, 32>}, {pipeline_mode = #tpu.pipeline_mode<synchronous>, transform_indices = @transform_2, window_bounds = array<i64: 1, 32>}, {pipeline_mode = #tpu.pipeline_mode<synchronous>, transform_indices = @transform_3, window_bounds = array<i64: 32, 64>}, {pipeline_mode = #tpu.pipeline_mode<synchronous>, transform_indices = @transform_4, window_bounds = array<i64: 1, 64>}, {pipeline_mode = #tpu.pipeline_mode<synchronous>, transform_indices = @transform_5, window_bounds = array<i64: 32, 64>}, {pipeline_mode = #tpu.pipeline_mode<synchronous>, transform_indices = @transform_6, window_bounds = array<i64: 1, 64>}, {pipeline_mode = #tpu.pipeline_mode<synchronous>, transform_indices = @transform_7, window_bounds = array<i64: 32, 128>}, {pipeline_mode = #tpu.pipeline_mode<synchronous>, transform_indices = @transform_8, window_bounds = array<i64: 1, 128>}, {pipeline_mode = #tpu.pipeline_mode<synchronous>, transform_indices = @transform_9, window_bounds = array<i64: 1, 128>}, {pipeline_mode = #tpu.pipeline_mode<synchronous>, transform_indices = @transform_10, window_bounds = array<i64: 1, 128>}, {pipeline_mode = #tpu.pipeline_mode<synchronous>, transform_indices = @transform_11, window_bounds = array<i64: 1, 128>}, {pipeline_mode = #tpu.pipeline_mode<synchronous>, transform_indices = @transform_12, window_bounds = array<i64: 1, 128>}, {pipeline_mode = #tpu.pipeline_mode<synchronous>, transform_indices = @transform_13, window_bounds = array<i64: 64, 32>}, {pipeline_mode = #tpu.pipeline_mode<synchronous>, transform_indices = @transform_14, window_bounds = array<i64: 1, 32>}, {transform_indices = @transform_15, window_bounds = array<i64: 32, 32>}]} {
    %c0 = arith.constant 0 : index
    %c0_0 = arith.constant 0 : index
    %0 = vector.load %arg1[%c0, %c0_0] : memref<32x32xf32, #tpu.memory_space<vmem>>, vector<32x32xf32>
    %cst = arith.constant dense<0.000000e+00> : vector<32xf32>
    %1 = vector.multi_reduction <add>, %0, %cst [1] : vector<32x32xf32> to vector<32xf32>
    %2 = vector.shape_cast %1 : vector<32xf32> to vector<32x1xf32>
    %cst_1 = arith.constant 3.200000e+01 : f32
    %3 = vector.broadcast %cst_1 : f32 to vector<32x1xf32>
    %4 = arith.divf %2, %3 : vector<32x1xf32>
    %5 = vector.broadcast %4 : vector<32x1xf32> to vector<32x32xf32>
    %6 = arith.subf %0, %5 : vector<32x32xf32>
    %7 = arith.mulf %6, %6 : vector<32x32xf32>
    %cst_2 = arith.constant dense<0.000000e+00> : vector<32xf32>
    %8 = vector.multi_reduction <add>, %7, %cst_2 [1] : vector<32x32xf32> to vector<32xf32>
    %9 = vector.shape_cast %8 : vector<32xf32> to vector<32x1xf32>
    %cst_3 = arith.constant 3.200000e+01 : f32
    %10 = vector.broadcast %cst_3 : f32 to vector<32x1xf32>
    %11 = arith.divf %9, %10 : vector<32x1xf32>
    %12 = vector.broadcast %4 : vector<32x1xf32> to vector<32x32xf32>
    %13 = arith.subf %0, %12 : vector<32x32xf32>
    %cst_4 = arith.constant 9.99999974E-6 : f32
    %14 = vector.broadcast %cst_4 : f32 to vector<32x1xf32>
    %15 = arith.addf %11, %14 : vector<32x1xf32>
    %16 = math.rsqrt %15 : vector<32x1xf32>
    %17 = vector.broadcast %16 : vector<32x1xf32> to vector<32x32xf32>
    %18 = arith.mulf %13, %17 : vector<32x32xf32>
    %c0_5 = arith.constant 0 : index
    %c0_6 = arith.constant 0 : index
    %19 = vector.load %arg2[%c0_5, %c0_6] : memref<1x32xf32, #tpu.memory_space<vmem>>, vector<1x32xf32>
    %20 = vector.broadcast %19 : vector<1x32xf32> to vector<32x32xf32>
    %21 = arith.mulf %18, %20 : vector<32x32xf32>
    %c0_7 = arith.constant 0 : index
    %c0_8 = arith.constant 0 : index
    %22 = vector.load %arg3[%c0_7, %c0_8] : memref<1x32xf32, #tpu.memory_space<vmem>>, vector<1x32xf32>
    %23 = vector.broadcast %22 : vector<1x32xf32> to vector<32x32xf32>
    %24 = arith.addf %21, %23 : vector<32x32xf32>
    %25 = arith.truncf %24 : vector<32x32xf32> to vector<32x32xbf16>
    %c0_9 = arith.constant 0 : index
    %c0_10 = arith.constant 0 : index
    %26 = vector.load %arg4[%c0_9, %c0_10] : memref<32x64xbf16, #tpu.memory_space<vmem>>, vector<32x64xbf16>
    %cst_11 = arith.constant dense<0.000000e+00> : vector<32x64xf32>
    %27 = tpu.matmul %25, %26, %cst_11 {dimension_numbers = #tpu.dot_dimension_numbers<[1], [0], [0], [1], [0, 0, 1, 1], [], []>} : vector<32x32xbf16>, vector<32x64xbf16>, vector<32x64xf32> -> vector<32x64xf32>
    %c0_12 = arith.constant 0 : index
    %c0_13 = arith.constant 0 : index
    %28 = vector.load %arg5[%c0_12, %c0_13] : memref<1x64xf32, #tpu.memory_space<vmem>>, vector<1x64xf32>
    %29 = vector.broadcast %28 : vector<1x64xf32> to vector<32x64xf32>
    %30 = arith.addf %27, %29 : vector<32x64xf32>
    %31 = arith.negf %30 : vector<32x64xf32>
    %32 = math.exp %31 : vector<32x64xf32>
    %cst_14 = arith.constant 1.000000e+00 : f32
    %33 = vector.broadcast %cst_14 : f32 to vector<32x64xf32>
    %34 = arith.addf %33, %32 : vector<32x64xf32>
    %35 = arith.divf %33, %34 : vector<32x64xf32>
    %36 = arith.mulf %30, %35 : vector<32x64xf32>
    %c0_15 = arith.constant 0 : index
    %c0_16 = arith.constant 0 : index
    %37 = vector.load %arg6[%c0_15, %c0_16] : memref<32x64xbf16, #tpu.memory_space<vmem>>, vector<32x64xbf16>
    %cst_17 = arith.constant dense<0.000000e+00> : vector<32x64xf32>
    %38 = tpu.matmul %25, %37, %cst_17 {dimension_numbers = #tpu.dot_dimension_numbers<[1], [0], [0], [1], [0, 0, 1, 1], [], []>} : vector<32x32xbf16>, vector<32x64xbf16>, vector<32x64xf32> -> vector<32x64xf32>
    %c0_18 = arith.constant 0 : index
    %c0_19 = arith.constant 0 : index
    %39 = vector.load %arg7[%c0_18, %c0_19] : memref<1x64xf32, #tpu.memory_space<vmem>>, vector<1x64xf32>
    %40 = vector.broadcast %39 : vector<1x64xf32> to vector<32x64xf32>
    %41 = arith.addf %38, %40 : vector<32x64xf32>
    %42 = arith.negf %41 : vector<32x64xf32>
    %43 = math.exp %42 : vector<32x64xf32>
    %cst_20 = arith.constant 1.000000e+00 : f32
    %44 = vector.broadcast %cst_20 : f32 to vector<32x64xf32>
    %45 = arith.addf %44, %43 : vector<32x64xf32>
    %46 = arith.divf %44, %45 : vector<32x64xf32>
    %47 = arith.mulf %41, %46 : vector<32x64xf32>
    %c0_21 = arith.constant 0 : index
    %c0_22 = arith.constant 0 : index
    %48 = vector.load %arg8[%c0_21, %c0_22] : memref<32x128xbf16, #tpu.memory_space<vmem>>, vector<32x128xbf16>
    %cst_23 = arith.constant dense<0.000000e+00> : vector<32x128xf32>
    %49 = tpu.matmul %25, %48, %cst_23 {dimension_numbers = #tpu.dot_dimension_numbers<[1], [0], [0], [1], [0, 0, 1, 1], [], []>} : vector<32x32xbf16>, vector<32x128xbf16>, vector<32x128xf32> -> vector<32x128xf32>
    %c0_24 = arith.constant 0 : index
    %c0_25 = arith.constant 0 : index
    %50 = vector.load %arg9[%c0_24, %c0_25] : memref<1x128xf32, #tpu.memory_space<vmem>>, vector<1x128xf32>
    %51 = vector.broadcast %50 : vector<1x128xf32> to vector<32x128xf32>
    %52 = arith.addf %49, %51 : vector<32x128xf32>
    %53 = arith.negf %52 : vector<32x128xf32>
    %54 = math.exp %53 : vector<32x128xf32>
    %cst_26 = arith.constant 1.000000e+00 : f32
    %55 = vector.broadcast %cst_26 : f32 to vector<32x128xf32>
    %56 = arith.addf %55, %54 : vector<32x128xf32>
    %57 = arith.divf %55, %56 : vector<32x128xf32>
    %58 = arith.mulf %52, %57 : vector<32x128xf32>
    %c0_27 = arith.constant 0 : index
    %c0_28 = arith.constant 0 : index
    %59 = vector.load %arg10[%c0_27, %c0_28] : memref<1x128xf32, #tpu.memory_space<vmem>>, vector<1x128xf32>
    %60 = vector.broadcast %59 : vector<1x128xf32> to vector<32x128xf32>
    %61 = arith.mulf %58, %60 : vector<32x128xf32>
    %c0_29 = arith.constant 0 : index
    %c0_30 = arith.constant 0 : index
    %62 = vector.load %arg11[%c0_29, %c0_30] : memref<1x128xf32, #tpu.memory_space<vmem>>, vector<1x128xf32>
    %63 = vector.broadcast %62 : vector<1x128xf32> to vector<32x128xf32>
    %64 = arith.addf %61, %63 : vector<32x128xf32>
    %cst_31 = arith.constant 6.250000e-02 : f32
    %65 = vector.broadcast %cst_31 : f32 to vector<32x128xf32>
    %66 = arith.mulf %64, %65 : vector<32x128xf32>
    %67 = arith.truncf %66 : vector<32x128xf32> to vector<32x128xbf16>
    %c0_32 = arith.constant 0 : index
    %c0_33 = arith.constant 0 : index
    %68 = vector.load %arg12[%c0_32, %c0_33] : memref<1x128xf32, #tpu.memory_space<vmem>>, vector<1x128xf32>
    %69 = vector.broadcast %68 : vector<1x128xf32> to vector<32x128xf32>
    %70 = arith.mulf %58, %69 : vector<32x128xf32>
    %c0_34 = arith.constant 0 : index
    %c0_35 = arith.constant 0 : index
    %71 = vector.load %arg13[%c0_34, %c0_35] : memref<1x128xf32, #tpu.memory_space<vmem>>, vector<1x128xf32>
    %72 = vector.broadcast %71 : vector<1x128xf32> to vector<32x128xf32>
    %73 = arith.addf %70, %72 : vector<32x128xf32>
    %74 = arith.truncf %73 : vector<32x128xf32> to vector<32x128xbf16>
    %75 = vector.shape_cast %67 : vector<32x128xbf16> to vector<2x16x128xbf16>
    %76 = vector.shape_cast %74 : vector<32x128xbf16> to vector<2x16x128xbf16>
    %77 = arith.truncf %36 : vector<32x64xf32> to vector<32x64xbf16>
    %78 = vector.shape_cast %77 : vector<32x64xbf16> to vector<2x16x64xbf16>
    "tpu.trace_start"() <{level = 10 : i32, message = "bqd,bkd->bqk"}> : () -> ()
    %cst_36 = arith.constant dense<0.000000e+00> : vector<2x16x16xf32>
    %79 = tpu.matmul %75, %76, %cst_36 {dimension_numbers = #tpu.dot_dimension_numbers<[2], [2], [1], [1], [0, 0, 0, 1, 1, 1], [0], [0]>} : vector<2x16x128xbf16>, vector<2x16x128xbf16>, vector<2x16x16xf32> -> vector<2x16x16xf32>
    "tpu.trace_stop"() : () -> ()
    %cst_37 = arith.constant 0.000000e+00 : f32
    %80 = vector.broadcast %cst_37 : f32 to vector<2x16x16xf32>
    %81 = arith.maximumf %79, %80 : vector<2x16x16xf32>
    %82 = arith.mulf %81, %81 : vector<2x16x16xf32>
    %83 = arith.truncf %82 : vector<2x16x16xf32> to vector<2x16x16xbf16>
    "tpu.trace_start"() <{level = 10 : i32, message = "bij,bjd->bid"}> : () -> ()
    %cst_38 = arith.constant dense<0.000000e+00> : vector<2x16x64xf32>
    %84 = tpu.matmul %83, %78, %cst_38 {dimension_numbers = #tpu.dot_dimension_numbers<[2], [1], [1], [2], [0, 0, 0, 1, 1, 2], [0], [0]>} : vector<2x16x16xbf16>, vector<2x16x64xbf16>, vector<2x16x64xf32> -> vector<2x16x64xf32>
    "tpu.trace_stop"() : () -> ()
    %85 = vector.shape_cast %84 : vector<2x16x64xf32> to vector<32x64xf32>
    %86 = arith.mulf %85, %47 : vector<32x64xf32>
    %87 = arith.truncf %86 : vector<32x64xf32> to vector<32x64xbf16>
    %c0_39 = arith.constant 0 : index
    %c0_40 = arith.constant 0 : index
    %88 = vector.load %arg14[%c0_39, %c0_40] : memref<64x32xbf16, #tpu.memory_space<vmem>>, vector<64x32xbf16>
    %cst_41 = arith.constant dense<0.000000e+00> : vector<32x32xf32>
    %89 = tpu.matmul %87, %88, %cst_41 {dimension_numbers = #tpu.dot_dimension_numbers<[1], [0], [0], [1], [0, 0, 1, 1], [], []>} : vector<32x64xbf16>, vector<64x32xbf16>, vector<32x32xf32> -> vector<32x32xf32>
    %c0_42 = arith.constant 0 : index
    %c0_43 = arith.constant 0 : index
    %90 = vector.load %arg15[%c0_42, %c0_43] : memref<1x32xf32, #tpu.memory_space<vmem>>, vector<1x32xf32>
    %91 = vector.broadcast %90 : vector<1x32xf32> to vector<32x32xf32>
    %92 = arith.addf %89, %91 : vector<32x32xf32>
    %93 = arith.addf %92, %0 : vector<32x32xf32>
    %c0_44 = arith.constant 0 : index
    %c0_45 = arith.constant 0 : index
    %94 = vector.load %arg16[%c0_44, %c0_45] : memref<32x32xf32, #tpu.memory_space<vmem>>, vector<32x32xf32>
    tpu.vector_store %arg16[%c0_44, %c0_45], %93 {strides = array<i32>} : memref<32x32xf32, #tpu.memory_space<vmem>>, vector<32x32xf32>,
    return
  }
  func.func @transform_0(%arg0: i32) -> (i32, i32) {
    %c0_i32 = arith.constant 0 : i32
    %c0_i32_0 = arith.constant 0 : i32
    return %arg0, %c0_i32 : i32, i32
  }
  func.func @transform_1(%arg0: i32) -> (i32, i32) {
    %c0_i32 = arith.constant 0 : i32
    %c0_i32_0 = arith.constant 0 : i32
    %c0_i32_1 = arith.constant 0 : i32
    return %c0_i32, %c0_i32_0 : i32, i32
  }
  func.func @transform_2(%arg0: i32) -> (i32, i32) {
    %c0_i32 = arith.constant 0 : i32
    %c0_i32_0 = arith.constant 0 : i32
    %c0_i32_1 = arith.constant 0 : i32
    return %c0_i32, %c0_i32_0 : i32, i32
  }
  func.func @transform_3(%arg0: i32) -> (i32, i32) {
    %c0_i32 = arith.constant 0 : i32
    %c0_i32_0 = arith.constant 0 : i32
    %c0_i32_1 = arith.constant 0 : i32
    return %c0_i32, %c0_i32_0 : i32, i32
  }
  func.func @transform_4(%arg0: i32) -> (i32, i32) {
    %c0_i32 = arith.constant 0 : i32
    %c0_i32_0 = arith.constant 0 : i32
    %c0_i32_1 = arith.constant 0 : i32
    return %c0_i32, %c0_i32_0 : i32, i32
  }
  func.func @transform_5(%arg0: i32) -> (i32, i32) {
    %c0_i32 = arith.constant 0 : i32
    %c0_i32_0 = arith.constant 0 : i32
    %c0_i32_1 = arith.constant 0 : i32
    return %c0_i32, %c0_i32_0 : i32, i32
  }
  func.func @transform_6(%arg0: i32) -> (i32, i32) {
    %c0_i32 = arith.constant 0 : i32
    %c0_i32_0 = arith.constant 0 : i32
    %c0_i32_1 = arith.constant 0 : i32
    return %c0_i32, %c0_i32_0 : i32, i32
  }
  func.func @transform_7(%arg0: i32) -> (i32, i32) {
    %c0_i32 = arith.constant 0 : i32
    %c0_i32_0 = arith.constant 0 : i32
    %c0_i32_1 = arith.constant 0 : i32
    return %c0_i32, %c0_i32_0 : i32, i32
  }
  func.func @transform_8(%arg0: i32) -> (i32, i32) {
    %c0_i32 = arith.constant 0 : i32
    %c0_i32_0 = arith.constant 0 : i32
    %c0_i32_1 = arith.constant 0 : i32
    return %c0_i32, %c0_i32_0 : i32, i32
  }
  func.func @transform_9(%arg0: i32) -> (i32, i32) {
    %c0_i32 = arith.constant 0 : i32
    %c0_i32_0 = arith.constant 0 : i32
    %c0_i32_1 = arith.constant 0 : i32
    return %c0_i32, %c0_i32_0 : i32, i32
  }
  func.func @transform_10(%arg0: i32) -> (i32, i32) {
    %c0_i32 = arith.constant 0 : i32
    %c0_i32_0 = arith.constant 0 : i32
    %c0_i32_1 = arith.constant 0 : i32
    return %c0_i32, %c0_i32_0 : i32, i32
  }
  func.func @transform_11(%arg0: i32) -> (i32, i32) {
    %c0_i32 = arith.constant 0 : i32
    %c0_i32_0 = arith.constant 0 : i32
    %c0_i32_1 = arith.constant 0 : i32
    return %c0_i32, %c0_i32_0 : i32, i32
  }
  func.func @transform_12(%arg0: i32) -> (i32, i32) {
    %c0_i32 = arith.constant 0 : i32
    %c0_i32_0 = arith.constant 0 : i32
    %c0_i32_1 = arith.constant 0 : i32
    return %c0_i32, %c0_i32_0 : i32, i32
  }
  func.func @transform_13(%arg0: i32) -> (i32, i32) {
    %c0_i32 = arith.constant 0 : i32
    %c0_i32_0 = arith.constant 0 : i32
    %c0_i32_1 = arith.constant 0 : i32
    return %c0_i32, %c0_i32_0 : i32, i32
  }
  func.func @transform_14(%arg0: i32) -> (i32, i32) {
    %c0_i32 = arith.constant 0 : i32
    %c0_i32_0 = arith.constant 0 : i32
    %c0_i32_1 = arith.constant 0 : i32
    return %c0_i32, %c0_i32_0 : i32, i32
  }
  func.func @transform_15(%arg0: i32) -> (i32, i32) {
    %c0_i32 = arith.constant 0 : i32
    %c0_i32_0 = arith.constant 0 : i32
    return %arg0, %c0_i32 : i32, i32
  }
}

</mosaic_0001>

<llo_original>
// kernel: tpu_custom_call.1
$region0: #{tpu_custom_call.1}
  #allocation0 [shape = 'u32[]', space=smem, size = 0x4, offset = 0x4, fixed_abs, tag = 'smem constant byte address 0x4 - core index']
  #allocation1 [shape = 'u32[144,128]{1,0:T(1,128)}', space=vmem, size = 0x12000, scoped, tag = 'internal scratch']
  %s0 = inlined_call_operand.vmem [shape: f32[32,32], index: 0, kind: input, shape index: {}]
  %s1 = inlined_call_operand.vmem [shape: f32[1,32], index: 1, kind: input, shape index: {}]
  %s2 = inlined_call_operand.vmem [shape: f32[1,32], index: 2, kind: input, shape index: {}]
  %s3 = inlined_call_operand.vmem [shape: bf16[32,64], index: 3, kind: input, shape index: {}]
  %s4 = inlined_call_operand.vmem [shape: f32[1,64], index: 4, kind: input, shape index: {}]
  %s5 = inlined_call_operand.hbm [shape: bf16[32,64], index: 5, kind: input, shape index: {}]
  %s6 = inlined_call_operand.vmem [shape: f32[1,64], index: 6, kind: input, shape index: {}]
  %s7 = inlined_call_operand.hbm [shape: bf16[32,128], index: 7, kind: input, shape index: {}]
  %s8 = inlined_call_operand.vmem [shape: f32[1,128], index: 8, kind: input, shape index: {}]
  %s9 = inlined_call_operand.vmem [shape: f32[1,128], index: 9, kind: input, shape index: {}]
  %s10 = inlined_call_operand.vmem [shape: f32[1,128], index: 10, kind: input, shape index: {}]
  %s11 = inlined_call_operand.vmem [shape: f32[1,128], index: 11, kind: input, shape index: {}]
  %s12 = inlined_call_operand.vmem [shape: f32[1,128], index: 12, kind: input, shape index: {}]
  %s13 = inlined_call_operand.vmem [shape: bf16[64,32], index: 13, kind: input, shape index: {}]
  %s14 = inlined_call_operand.vmem [shape: f32[1,32], index: 14, kind: input, shape index: {}]
  %s15 = inlined_call_operand.hbm [shape: f32[32,32], index: 15, kind: output, shape index: {}]
  %s16 = sld [smem:[#allocation0]]
  $region78: #{tpu_custom_call.1} parent=0
    _
  %s18 = ssub.s32 1, %s16
  %s19 = scalar_select 0, %s18, %s16
  $region1: #{tpu_custom_call.1} parent=0
    #allocation2 [shape = 'u8[8192]{0}', space=vmem, size = 0x2000, scoped, tag = 'input window, operand 5, single buffered']
    #allocation3 [shape = 's32[1]{0}', space=sflag, size = 0x4, scoped, tag = 'scoped memory for tpu_custom_call.1']
    #allocation4 [shape = 's32[1]{0}', space=sflag, size = 0x4, scoped, tag = 'scoped memory for tpu_custom_call.1']
    #allocation5 [shape = 'u8[8192]{0}', space=vmem, size = 0x2000, scoped, tag = 'input window, operand 7, single buffered']
    #allocation6 [shape = 's32[1]{0}', space=sflag, size = 0x4, scoped, tag = 'scoped memory for tpu_custom_call.1']
    #allocation7 [shape = 'u8[16384]{0}', space=vmem, size = 0x4000, scoped, tag = 'output window, operand 0, single buffered']
    %20 = vsyncpa [#allocation3], 0
    %21 = vsyncpa [#allocation6], 0
    %22 = vsyncpa [#allocation4], 0
    // Predicated region
    $region2: #{tpu_custom_call.1} parent=1 // pred_check
      _
    $region3: #{tpu_custom_call.1} parent=1 // pred_check_branch
      %24 = sbr.rel (0) target = $region5
    $region4: #{tpu_custom_call.1} parent=1 // pred_region
      _
    $region5: #{tpu_custom_call.1} parent=1 // pred_fallthru
      _
    // Predicated region
    $region6: #{tpu_custom_call.1} parent=1 // pred_check
      _
    $region7: #{tpu_custom_call.1} parent=1 // pred_check_branch
      %26 = sbr.rel (0) target = $region9
    $region8: #{tpu_custom_call.1} parent=1 // pred_region
      _
    $region9: #{tpu_custom_call.1} parent=1 // pred_fallthru
      _
    // Predicated region
    $region10: #{tpu_custom_call.1} parent=1 // pred_check
      _
    $region11: #{tpu_custom_call.1} parent=1 // pred_check_branch
      %28 = sbr.rel (0) target = $region13
    $region12: #{tpu_custom_call.1} parent=1 // pred_region
      _
    $region13: #{tpu_custom_call.1} parent=1 // pred_fallthru
      _
    // Predicated region
    $region14: #{tpu_custom_call.1} parent=1 // pred_check
      _
    $region15: #{tpu_custom_call.1} parent=1 // pred_check_branch
      %30 = sbr.rel (0) target = $region17
    $region16: #{tpu_custom_call.1} parent=1 // pred_region
      _
    $region17: #{tpu_custom_call.1} parent=1 // pred_fallthru
      _
    // Predicated region
    $region18: #{tpu_custom_call.1} parent=1 // pred_check
      _
    $region19: #{tpu_custom_call.1} parent=1 // pred_check_branch
      %32 = sbr.rel (0) target = $region21
    $region20: #{tpu_custom_call.1} parent=1 // pred_region
      _
    $region21: #{tpu_custom_call.1} parent=1 // pred_fallthru
      _
    // Predicated region
    $region22: #{tpu_custom_call.1} parent=1 // pred_check
      _
    $region23: #{tpu_custom_call.1} parent=1 // pred_check_branch
      %34 = sbr.rel (0) target = $region25
    $region24: #{tpu_custom_call.1} parent=1 // pred_region
      %s36 = ssub.s32 256, 256
      %37 = vsyncadd [#allocation3], %s36
      %s38 = sshll.u32 [#allocation2], 4
      %s39 = int_to_ptr.vmem [resolvable:$true] %s38
      %44 = dma.hbm_to_vmem [thread:$0]  %s5, 256, %s39, [#allocation3], 64, 64, 4
    $region25: #{tpu_custom_call.1} parent=1 // pred_fallthru
      _
    // Predicated region
    $region26: #{tpu_custom_call.1} parent=1 // pred_check
      _
    $region27: #{tpu_custom_call.1} parent=1 // pred_check_branch
      %46 = sbr.rel (0) target = $region29
    $region28: #{tpu_custom_call.1} parent=1 // pred_region
      _
    $region29: #{tpu_custom_call.1} parent=1 // pred_fallthru
      _
    // Predicated region
    $region30: #{tpu_custom_call.1} parent=1 // pred_check
      _
    $region31: #{tpu_custom_call.1} parent=1 // pred_check_branch
      %48 = sbr.rel (0) target = $region33
    $region32: #{tpu_custom_call.1} parent=1 // pred_region
      %s50 = ssub.s32 256, 256
      %51 = vsyncadd [#allocation6], %s50
      %s52 = sshll.u32 [#allocation5], 4
      %s53 = int_to_ptr.vmem [resolvable:$true] %s52
      %58 = dma.hbm_to_vmem [thread:$0]  %s7, 256, %s53, [#allocation6], 64, 64, 4
    $region33: #{tpu_custom_call.1} parent=1 // pred_fallthru
      _
    // Predicated region
    $region34: #{tpu_custom_call.1} parent=1 // pred_check
      _
    $region35: #{tpu_custom_call.1} parent=1 // pred_check_branch
      %60 = sbr.rel (0) target = $region37
    $region36: #{tpu_custom_call.1} parent=1 // pred_region
      _
    $region37: #{tpu_custom_call.1} parent=1 // pred_fallthru
      _
    // Predicated region
    $region38: #{tpu_custom_call.1} parent=1 // pred_check
      _
    $region39: #{tpu_custom_call.1} parent=1 // pred_check_branch
      %62 = sbr.rel (0) target = $region41
    $region40: #{tpu_custom_call.1} parent=1 // pred_region
      _
    $region41: #{tpu_custom_call.1} parent=1 // pred_fallthru
      _
    // Predicated region
    $region42: #{tpu_custom_call.1} parent=1 // pred_check
      _
    $region43: #{tpu_custom_call.1} parent=1 // pred_check_branch
      %64 = sbr.rel (0) target = $region45
    $region44: #{tpu_custom_call.1} parent=1 // pred_region
      _
    $region45: #{tpu_custom_call.1} parent=1 // pred_fallthru
      _
    // Predicated region
    $region46: #{tpu_custom_call.1} parent=1 // pred_check
      _
    $region47: #{tpu_custom_call.1} parent=1 // pred_check_branch
      %66 = sbr.rel (0) target = $region49
    $region48: #{tpu_custom_call.1} parent=1 // pred_region
      _
    $region49: #{tpu_custom_call.1} parent=1 // pred_fallthru
      _
    // Predicated region
    $region50: #{tpu_custom_call.1} parent=1 // pred_check
      _
    $region51: #{tpu_custom_call.1} parent=1 // pred_check_branch
      %68 = sbr.rel (0) target = $region53
    $region52: #{tpu_custom_call.1} parent=1 // pred_region
      _
    $region53: #{tpu_custom_call.1} parent=1 // pred_fallthru
      _
    // Predicated region
    $region54: #{tpu_custom_call.1} parent=1 // pred_check
      _
    $region55: #{tpu_custom_call.1} parent=1 // pred_check_branch
      %70 = sbr.rel (0) target = $region57
    $region56: #{tpu_custom_call.1} parent=1 // pred_region
      _
    $region57: #{tpu_custom_call.1} parent=1 // pred_fallthru
      _
    // Predicated region
    $region58: #{tpu_custom_call.1} parent=1 // pred_check
      _
    $region59: #{tpu_custom_call.1} parent=1 // pred_check_branch
      %72 = sbr.rel (0) target = $region61
    $region60: #{tpu_custom_call.1} parent=1 // pred_region
      _
    $region61: #{tpu_custom_call.1} parent=1 // pred_fallthru
      _
    // Predicated region
    $region62: #{tpu_custom_call.1} parent=1 // pred_check
      _
    $region63: #{tpu_custom_call.1} parent=1 // pred_check_branch
      %74 = sbr.rel (0) target = $region65
    $region64: #{tpu_custom_call.1} parent=1 // pred_region
      %75 = dma.done [#allocation3], 256
    $region65: #{tpu_custom_call.1} parent=1 // pred_fallthru
      _
    // Predicated region
    $region66: #{tpu_custom_call.1} parent=1 // pred_check
      _
    $region67: #{tpu_custom_call.1} parent=1 // pred_check_branch
      %77 = sbr.rel (0) target = $region69
    $region68: #{tpu_custom_call.1} parent=1 // pred_region
      %78 = dma.done [#allocation6], 256
    $region69: #{tpu_custom_call.1} parent=1 // pred_fallthru
      _
    %v80 = vld [vmem:[%s0] sm:$0xff]
    %v81 = vld [vmem:[%s0 + $0x8] sm:$0xff]
    %v82 = vld [vmem:[%s0 + $0x10] sm:$0xff]
    %v83 = vld [vmem:[%s0 + $0x18] sm:$0xff]
    %vm84 = vcmask 261120
    %v85 = vsel %vm84, %v80, 0.0
    %86 = vadd.xlane.f32.xlu0 %v85
    %v87 = vpop.xlane.xlu0 %86
    %v88 = vsel %vm84, %v81, 0.0
    %89 = vadd.xlane.f32.xlu0 %v88
    %v90 = vpop.xlane.xlu0 %89
    %v91 = vsel %vm84, %v82, 0.0
    %92 = vadd.xlane.f32.xlu0 %v91
    %v93 = vpop.xlane.xlu0 %92
    %v94 = vsel %vm84, %v83, 0.0
    %95 = vadd.xlane.f32.xlu0 %v94
    %v96 = vpop.xlane.xlu0 %95
    %v97 = vrcp.pop 32.0
    %v98 = vmul.f32 %v87, %v97
    %v99 = vmul.f32 %v90, %v97
    %v100 = vmul.f32 %v93, %v97
    %v101 = vmul.f32 %v96, %v97
    %v102 = vsub.f32 %v80, %v98
    %v103 = vsub.f32 %v81, %v99
    %v104 = vsub.f32 %v82, %v100
    %v105 = vsub.f32 %v83, %v101
    %v106 = vmul.f32 %v102, %v102
    %v107 = vmul.f32 %v103, %v103
    %v108 = vmul.f32 %v104, %v104
    %v109 = vmul.f32 %v105, %v105
    %v110 = vsel %vm84, %v106, 0.0
    %111 = vadd.xlane.f32.xlu0 %v110
    %v112 = vpop.xlane.xlu0 %111
    %v113 = vsel %vm84, %v107, 0.0
    %114 = vadd.xlane.f32.xlu0 %v113
    %v115 = vpop.xlane.xlu0 %114
    %v116 = vsel %vm84, %v108, 0.0
    %117 = vadd.xlane.f32.xlu0 %v116
    %v118 = vpop.xlane.xlu0 %117
    %v119 = vsel %vm84, %v109, 0.0
    %120 = vadd.xlane.f32.xlu0 %v119
    %v121 = vpop.xlane.xlu0 %120
    %v122 = vmul.f32 %v112, %v97
    %v123 = vmul.f32 %v115, %v97
    %v124 = vmul.f32 %v118, %v97
    %v125 = vmul.f32 %v121, %v97
    %v126 = vadd.f32 %v122, 1e-05
    %v127 = vadd.f32 %v123, 1e-05
    %v128 = vadd.f32 %v124, 1e-05
    %v129 = vadd.f32 %v125, 1e-05
    %v130 = vrsqrt.pop %v126
    %v131 = vrsqrt.pop %v127
    %v132 = vrsqrt.pop %v128
    %v133 = vrsqrt.pop %v129
    %v134 = vmul.f32 %v102, %v130
    %v135 = vmul.f32 %v103, %v131
    %v136 = vmul.f32 %v104, %v132
    %v137 = vmul.f32 %v105, %v133
    %v138 = vld [vmem:[%s1] sm:$0x1]
    %v140 = vlaneseq
    %v141 = vshrl.u32 %v140, 7
    %v142 = vsub.s32 0, %v141
    %v143 = vrot.slane %v138, %v142
    %v145 = vmul.f32 %v134, %v143
    %v146 = vmul.f32 %v135, %v143
    %v147 = vmul.f32 %v136, %v143
    %v148 = vmul.f32 %v137, %v143
    %v149 = vld [vmem:[%s2] sm:$0x1]
    %v151 = vlaneseq
    %v152 = vshrl.u32 %v151, 7
    %v153 = vsub.s32 0, %v152
    %v154 = vrot.slane %v149, %v153
    %v156 = vadd.f32 %v145, %v154
    %v157 = vadd.f32 %v146, %v154
    %v158 = vadd.f32 %v147, %v154
    %v159 = vadd.f32 %v148, %v154
    %v160 = vpack.c.bf16 %v157, %v156
    %v161 = vpack.c.bf16 %v159, %v158
    %v162 = vld [vmem:[%s3] sm:$0xf]
    %v163 = vld [vmem:[%s3 + $0x4] sm:$0xf]
    %v164 = vld [vmem:[%s3 + $0x8] sm:$0xf]
    %v165 = vld [vmem:[%s3 + $0xc] sm:$0xf]
    %v166 = vld [vmem:[%s4] sm:$0x1]
    %v168 = vlaneseq
    %v169 = vshrl.u32 %v168, 7
    %v170 = vsub.s32 0, %v169
    %v171 = vrot.slane %v166, %v170
    %v177 = vunpack.c.l.b16 %v162
    %v178 = vunpack.c.l.b16 %v163
    %v179 = vunpack.c.l.b16 %v164
    %v180 = vunpack.c.l.b16 %v165
    %v181 = vpack.c.b16 %v178, %v177
    %v182 = vpack.c.b16 %v180, %v179
    %v186 = vsel %vm84, %v160, 0
    %v189 = vsel %vm84, %v161, 0
    %191 = vmatprep.subr.bf16.mxu0 0
    %192 = vmatpush1.bf16.msra.mxu0 %v181
    %193 = vmatprep.subr.bf16.mxu0 0
    %194 = vmatpush1.bf16.msra.mxu0 %v182
    %195 = vmatprep.subr.bf16.mxu0 0
    %196 = vmatpush1.bf16.msra.mxu0 0
    %197 = vmatprep.subr.bf16.mxu0 0
    %198 = vmatpush1.bf16.msra.mxu0 0
    %199 = vmatprep.subr.bf16.mxu0 0
    %200 = vmatpush1.bf16.msra.mxu0 0
    %201 = vmatprep.subr.bf16.mxu0 0
    %202 = vmatpush1.bf16.msra.mxu0 0
    %203 = vmatprep.subr.bf16.mxu0 0
    %204 = vmatpush1.bf16.msra.mxu0 0
    %205 = vmatprep.subr.bf16.mxu0 0
    %206 = vmatpush1.bf16.msra.mxu0 0
    %207 = vmatprep.subr.bf16.mxu0 0
    %208 = vmatpush1.bf16.msra.mxu0 0
    %209 = vmatprep.subr.bf16.mxu0 0
    %210 = vmatpush1.bf16.msra.mxu0 0
    %211 = vmatprep.subr.bf16.mxu0 0
    %212 = vmatpush1.bf16.msra.mxu0 0
    %213 = vmatprep.subr.bf16.mxu0 0
    %214 = vmatpush1.bf16.msra.mxu0 0
    %215 = vmatprep.subr.bf16.mxu0 0
    %216 = vmatpush1.bf16.msra.mxu0 0
    %217 = vmatprep.subr.bf16.mxu0 0
    %218 = vmatpush1.bf16.msra.mxu0 0
    %219 = vmatprep.subr.bf16.mxu0 0
    %220 = vmatpush1.bf16.msra.mxu0 0
    %221 = vmatprep.subr.bf16.mxu0 0
    %222 = vmatpush1.bf16.msra.mxu0 0
    %223 = vmatprep.mubr.bf16.mxu0 0
    %224 = vmatmul.mubr.bf16.gmra.mrb[0].mxu0 %v186
    %v225 = vpop.f32.mrb[0].mxu0
    %v226 = vadd.f32 %v171, %v225
    %v227 = vpop.f32.mrb[0].mxu0
    %v228 = vpop.f32.mrb[0].mxu0
    %v229 = vadd.f32 %v171, %v228
    %v230 = vpop.f32.mrb[0].mxu0
    %231 = vmatprep.mubr.bf16.mxu0 0
    %232 = vmatmul.mubr.bf16.gmra.mrb[0].mxu0 %v189
    %v233 = vpop.f32.mrb[0].mxu0
    %v234 = vadd.f32 %v171, %v233
    %v235 = vpop.f32.mrb[0].mxu0
    %v236 = vpop.f32.mrb[0].mxu0
    %v237 = vadd.f32 %v171, %v236
    %v238 = vpop.f32.mrb[0].mxu0
    %239 = vdwg.mxu0
    %v240 = vxor.u32 %v226, 2147483648
    %v241 = vxor.u32 %v229, 2147483648
    %v242 = vxor.u32 %v234, 2147483648
    %v243 = vxor.u32 %v237, 2147483648
    %v244 = vmul.f32 %v240, 1.442695
    %v245 = vpow.pop %v244
    %v246 = vmul.f32 %v241, 1.442695
    %v247 = vpow.pop %v246
    %v248 = vmul.f32 %v242, 1.442695
    %v249 = vpow.pop %v248
    %v250 = vmul.f32 %v243, 1.442695
    %v251 = vpow.pop %v250
    %v252 = vadd.f32 %v245, 1.0
    %v253 = vadd.f32 %v247, 1.0
    %v254 = vadd.f32 %v249, 1.0
    %v255 = vadd.f32 %v251, 1.0
    %v256 = vrcp.pop %v252
    %v257 = vmul.f32 1.0, %v256
    %v258 = vrcp.pop %v253
    %v259 = vmul.f32 1.0, %v258
    %v260 = vrcp.pop %v254
    %v261 = vmul.f32 1.0, %v260
    %v262 = vrcp.pop %v255
    %v263 = vmul.f32 1.0, %v262
    %v264 = vmul.f32 %v226, %v257
    %v265 = vmul.f32 %v229, %v259
    %v266 = vmul.f32 %v234, %v261
    %v267 = vmul.f32 %v237, %v263
    %v268 = vld [vmem:[#allocation2] sm:$0xf]
    %v269 = vld [vmem:[#allocation2 + $0x4] sm:$0xf]
    %v270 = vld [vmem:[#allocation2 + $0x8] sm:$0xf]
    %v271 = vld [vmem:[#allocation2 + $0xc] sm:$0xf]
    %v272 = vld [vmem:[%s6] sm:$0x1]
    %v274 = vlaneseq
    %v275 = vshrl.u32 %v274, 7
    %v276 = vsub.s32 0, %v275
    %v277 = vrot.slane %v272, %v276
    %v283 = vunpack.c.l.b16 %v268
    %v284 = vunpack.c.l.b16 %v269
    %v285 = vunpack.c.l.b16 %v270
    %v286 = vunpack.c.l.b16 %v271
    %v287 = vpack.c.b16 %v284, %v283
    %v288 = vpack.c.b16 %v286, %v285
    %291 = vmatprep.subr.bf16.mxu0 0
    %292 = vmatpush1.bf16.msra.mxu0 %v287
    %293 = vmatprep.subr.bf16.mxu0 0
    %294 = vmatpush1.bf16.msra.mxu0 %v288
    %295 = vmatprep.subr.bf16.mxu0 0
    %296 = vmatpush1.bf16.msra.mxu0 0
    %297 = vmatprep.subr.bf16.mxu0 0
    %298 = vmatpush1.bf16.msra.mxu0 0
    %299 = vmatprep.subr.bf16.mxu0 0
    %300 = vmatpush1.bf16.msra.mxu0 0
    %301 = vmatprep.subr.bf16.mxu0 0
    %302 = vmatpush1.bf16.msra.mxu0 0
    %303 = vmatprep.subr.bf16.mxu0 0
    %304 = vmatpush1.bf16.msra.mxu0 0
    %305 = vmatprep.subr.bf16.mxu0 0
    %306 = vmatpush1.bf16.msra.mxu0 0
    %307 = vmatprep.subr.bf16.mxu0 0
    %308 = vmatpush1.bf16.msra.mxu0 0
    %309 = vmatprep.subr.bf16.mxu0 0
    %310 = vmatpush1.bf16.msra.mxu0 0
    %311 = vmatprep.subr.bf16.mxu0 0
    %312 = vmatpush1.bf16.msra.mxu0 0
    %313 = vmatprep.subr.bf16.mxu0 0
    %314 = vmatpush1.bf16.msra.mxu0 0
    %315 = vmatprep.subr.bf16.mxu0 0
    %316 = vmatpush1.bf16.msra.mxu0 0
    %317 = vmatprep.subr.bf16.mxu0 0
    %318 = vmatpush1.bf16.msra.mxu0 0
    %319 = vmatprep.subr.bf16.mxu0 0
    %320 = vmatpush1.bf16.msra.mxu0 0
    %321 = vmatprep.subr.bf16.mxu0 0
    %322 = vmatpush1.bf16.msra.mxu0 0
    %323 = vmatprep.mubr.bf16.mxu0 0
    %324 = vmatmul.mubr.bf16.gmra.mrb[0].mxu0 %v186
    %v325 = vpop.f32.mrb[0].mxu0
    %v326 = vadd.f32 %v277, %v325
    %v327 = vpop.f32.mrb[0].mxu0
    %v328 = vpop.f32.mrb[0].mxu0
    %v329 = vadd.f32 %v277, %v328
    %v330 = vpop.f32.mrb[0].mxu0
    %331 = vmatprep.mubr.bf16.mxu0 0
    %332 = vmatmul.mubr.bf16.gmra.mrb[0].mxu0 %v189
    %v333 = vpop.f32.mrb[0].mxu0
    %v334 = vadd.f32 %v277, %v333
    %v335 = vpop.f32.mrb[0].mxu0
    %v336 = vpop.f32.mrb[0].mxu0
    %v337 = vadd.f32 %v277, %v336
    %v338 = vpop.f32.mrb[0].mxu0
    %339 = vdwg.mxu0
    %v340 = vxor.u32 %v326, 2147483648
    %v341 = vxor.u32 %v329, 2147483648
    %v342 = vxor.u32 %v334, 2147483648
    %v343 = vxor.u32 %v337, 2147483648
    %v344 = vmul.f32 %v340, 1.442695
    %v345 = vpow.pop %v344
    %v346 = vmul.f32 %v341, 1.442695
    %v347 = vpow.pop %v346
    %v348 = vmul.f32 %v342, 1.442695
    %v349 = vpow.pop %v348
    %v350 = vmul.f32 %v343, 1.442695
    %v351 = vpow.pop %v350
    %v352 = vadd.f32 %v345, 1.0
    %v353 = vadd.f32 %v347, 1.0
    %v354 = vadd.f32 %v349, 1.0
    %v355 = vadd.f32 %v351, 1.0
    %v356 = vrcp.pop %v352
    %v357 = vmul.f32 1.0, %v356
    %v358 = vrcp.pop %v353
    %v359 = vmul.f32 1.0, %v358
    %v360 = vrcp.pop %v354
    %v361 = vmul.f32 1.0, %v360
    %v362 = vrcp.pop %v355
    %v363 = vmul.f32 1.0, %v362
    %v364 = vmul.f32 %v326, %v357
    %v365 = vmul.f32 %v329, %v359
    %v366 = vmul.f32 %v334, %v361
    %v367 = vmul.f32 %v337, %v363
    %v368 = vld [vmem:[#allocation5] sm:$0xf]
    %v369 = vld [vmem:[#allocation5 + $0x4] sm:$0xf]
    %v370 = vld [vmem:[#allocation5 + $0x8] sm:$0xf]
    %v371 = vld [vmem:[#allocation5 + $0xc] sm:$0xf]
    %v372 = vld [vmem:[%s8] sm:$0x1]
    %v374 = vlaneseq
    %v375 = vshrl.u32 %v374, 7
    %v376 = vsub.s32 0, %v375
    %v377 = vrot.slane %v372, %v376
    %v383 = vunpack.c.l.b16 %v368
    %v384 = vunpack.c.l.b16 %v369
    %v385 = vunpack.c.l.b16 %v370
    %v386 = vunpack.c.l.b16 %v371
    %v387 = vpack.c.b16 %v384, %v383
    %v388 = vpack.c.b16 %v386, %v385
    %391 = vmatprep.subr.bf16.mxu0 0
    %392 = vmatpush1.bf16.msra.mxu0 %v387
    %393 = vmatprep.subr.bf16.mxu0 0
    %394 = vmatpush1.bf16.msra.mxu0 %v388
    %395 = vmatprep.subr.bf16.mxu0 0
    %396 = vmatpush1.bf16.msra.mxu0 0
    %397 = vmatprep.subr.bf16.mxu0 0
    %398 = vmatpush1.bf16.msra.mxu0 0
    %399 = vmatprep.subr.bf16.mxu0 0
    %400 = vmatpush1.bf16.msra.mxu0 0
    %401 = vmatprep.subr.bf16.mxu0 0
    %402 = vmatpush1.bf16.msra.mxu0 0
    %403 = vmatprep.subr.bf16.mxu0 0
    %404 = vmatpush1.bf16.msra.mxu0 0
    %405 = vmatprep.subr.bf16.mxu0 0
    %406 = vmatpush1.bf16.msra.mxu0 0
    %407 = vmatprep.subr.bf16.mxu0 0
    %408 = vmatpush1.bf16.msra.mxu0 0
    %409 = vmatprep.subr.bf16.mxu0 0
    %410 = vmatpush1.bf16.msra.mxu0 0
    %411 = vmatprep.subr.bf16.mxu0 0
    %412 = vmatpush1.bf16.msra.mxu0 0
    %413 = vmatprep.subr.bf16.mxu0 0
    %414 = vmatpush1.bf16.msra.mxu0 0
    %415 = vmatprep.subr.bf16.mxu0 0
    %416 = vmatpush1.bf16.msra.mxu0 0
    %417 = vmatprep.subr.bf16.mxu0 0
    %418 = vmatpush1.bf16.msra.mxu0 0
    %419 = vmatprep.subr.bf16.mxu0 0
    %420 = vmatpush1.bf16.msra.mxu0 0
    %421 = vmatprep.subr.bf16.mxu0 0
    %422 = vmatpush1.bf16.msra.mxu0 0
    %423 = vmatprep.mubr.bf16.mxu0 0
    %424 = vmatmul.mubr.bf16.gmra.mrb[0].mxu0 %v186
    %v425 = vpop.f32.mrb[0].mxu0
    %v426 = vadd.f32 %v377, %v425
    %v427 = vpop.f32.mrb[0].mxu0
    %v428 = vpop.f32.mrb[0].mxu0
    %v429 = vadd.f32 %v377, %v428
    %v430 = vpop.f32.mrb[0].mxu0
    %431 = vmatprep.mubr.bf16.mxu0 0
    %432 = vmatmul.mubr.bf16.gmra.mrb[0].mxu0 %v189
    %v433 = vpop.f32.mrb[0].mxu0
    %v434 = vadd.f32 %v377, %v433
    %v435 = vpop.f32.mrb[0].mxu0
    %v436 = vpop.f32.mrb[0].mxu0
    %v437 = vadd.f32 %v377, %v436
    %v438 = vpop.f32.mrb[0].mxu0
    %439 = vdwg.mxu0
    %v440 = vxor.u32 %v426, 2147483648
    %v441 = vxor.u32 %v429, 2147483648
    %v442 = vxor.u32 %v434, 2147483648
    %v443 = vxor.u32 %v437, 2147483648
    %v444 = vmul.f32 %v440, 1.442695
    %v445 = vpow.pop %v444
    %v446 = vmul.f32 %v441, 1.442695
    %v447 = vpow.pop %v446
    %v448 = vmul.f32 %v442, 1.442695
    %v449 = vpow.pop %v448
    %v450 = vmul.f32 %v443, 1.442695
    %v451 = vpow.pop %v450
    %v452 = vadd.f32 %v445, 1.0
    %v453 = vadd.f32 %v447, 1.0
    %v454 = vadd.f32 %v449, 1.0
    %v455 = vadd.f32 %v451, 1.0
    %v456 = vrcp.pop %v452
    %v457 = vmul.f32 1.0, %v456
    %v458 = vrcp.pop %v453
    %v459 = vmul.f32 1.0, %v458
    %v460 = vrcp.pop %v454
    %v461 = vmul.f32 1.0, %v460
    %v462 = vrcp.pop %v455
    %v463 = vmul.f32 1.0, %v462
    %v464 = vmul.f32 %v426, %v457
    %v465 = vmul.f32 %v429, %v459
    %v466 = vmul.f32 %v434, %v461
    %v467 = vmul.f32 %v437, %v463
    %v468 = vld [vmem:[%s9] sm:$0x1]
    %v470 = vlaneseq
    %v471 = vshrl.u32 %v470, 7
    %v472 = vsub.s32 0, %v471
    %v473 = vrot.slane %v468, %v472
    %v475 = vmul.f32 %v464, %v473
    %v476 = vmul.f32 %v465, %v473
    %v477 = vmul.f32 %v466, %v473
    %v478 = vmul.f32 %v467, %v473
    %v479 = vld [vmem:[%s10] sm:$0x1]
    %v481 = vlaneseq
    %v482 = vshrl.u32 %v481, 7
    %v483 = vsub.s32 0, %v482
    %v484 = vrot.slane %v479, %v483
    %v486 = vadd.f32 %v475, %v484
    %v487 = vadd.f32 %v476, %v484
    %v488 = vadd.f32 %v477, %v484
    %v489 = vadd.f32 %v478, %v484
    %v490 = vmul.f32 %v486, 0.0625
    %v491 = vmul.f32 %v487, 0.0625
    %v492 = vmul.f32 %v488, 0.0625
    %v493 = vmul.f32 %v489, 0.0625
    %v494 = vpack.c.bf16 %v491, %v490
    %v495 = vpack.c.bf16 %v493, %v492
    %v496 = vld [vmem:[%s11] sm:$0x1]
    %v498 = vlaneseq
    %v499 = vshrl.u32 %v498, 7
    %v500 = vsub.s32 0, %v499
    %v501 = vrot.slane %v496, %v500
    %v503 = vmul.f32 %v464, %v501
    %v504 = vmul.f32 %v465, %v501
    %v505 = vmul.f32 %v466, %v501
    %v506 = vmul.f32 %v467, %v501
    %v507 = vld [vmem:[%s12] sm:$0x1]
    %v509 = vlaneseq
    %v510 = vshrl.u32 %v509, 7
    %v511 = vsub.s32 0, %v510
    %v512 = vrot.slane %v507, %v511
    %v514 = vadd.f32 %v503, %v512
    %v515 = vadd.f32 %v504, %v512
    %v516 = vadd.f32 %v505, %v512
    %v517 = vadd.f32 %v506, %v512
    %v518 = vpack.c.bf16 %v515, %v514
    %v519 = vpack.c.bf16 %v517, %v516
    %v520 = vpack.c.bf16 %v265, %v264
    %v521 = vpack.c.bf16 %v267, %v266
    %522 = vmatprep.subr.bf16.mxu0 0
    %523 = vmatpush1.bf16.xpose.msra.mxu0 %v518
    %524 = vmatprep.subr.bf16.mxu0 0
    %525 = vmatpush1.bf16.xpose.msra.mxu0 0
    %526 = vmatprep.subr.bf16.mxu0 0
    %527 = vmatpush1.bf16.xpose.msra.mxu0 0
    %528 = vmatprep.subr.bf16.mxu0 0
    %529 = vmatpush1.bf16.xpose.msra.mxu0 0
    %530 = vmatprep.subr.bf16.mxu0 0
    %531 = vmatpush1.bf16.xpose.msra.mxu0 0
    %532 = vmatprep.subr.bf16.mxu0 0
    %533 = vmatpush1.bf16.xpose.msra.mxu0 0
    %534 = vmatprep.subr.bf16.mxu0 0
    %535 = vmatpush1.bf16.xpose.msra.mxu0 0
    %536 = vmatprep.subr.bf16.mxu0 0
    %537 = vmatpush1.bf16.xpose.msra.mxu0 0
    %538 = vmatprep.subr.bf16.mxu0 0
    %539 = vmatpush1.bf16.xpose.msra.mxu0 0
    %540 = vmatprep.subr.bf16.mxu0 0
    %541 = vmatpush1.bf16.xpose.msra.mxu0 0
    %542 = vmatprep.subr.bf16.mxu0 0
    %543 = vmatpush1.bf16.xpose.msra.mxu0 0
    %544 = vmatprep.subr.bf16.mxu0 0
    %545 = vmatpush1.bf16.xpose.msra.mxu0 0
    %546 = vmatprep.subr.bf16.mxu0 0
    %547 = vmatpush1.bf16.xpose.msra.mxu0 0
    %548 = vmatprep.subr.bf16.mxu0 0
    %549 = vmatpush1.bf16.xpose.msra.mxu0 0
    %550 = vmatprep.subr.bf16.mxu0 0
    %551 = vmatpush1.bf16.xpose.msra.mxu0 0
    %552 = vmatprep.subr.bf16.mxu0 0
    %553 = vmatpush1.bf16.xpose.msra.mxu0 0
    %554 = vmatprep.mubr.bf16.mxu0 0
    %555 = vmatmul.mubr.bf16.gmra.mrb[0].mxu0 %v494
    %v556 = vpop.f32.mrb[0].mxu0
    %v557 = vadd.f32 0.0, %v556
    %v558 = vpop.f32.mrb[0].mxu0
    %v559 = vpop.f32.mrb[0].mxu0
    %v560 = vadd.f32 0.0, %v559
    %v561 = vpop.f32.mrb[0].mxu0
    %562 = vdwg.mxu0
    %563 = vmatprep.subr.bf16.mxu0 0
    %564 = vmatpush1.bf16.xpose.msra.mxu0 %v519
    %565 = vmatprep.subr.bf16.mxu0 0
    %566 = vmatpush1.bf16.xpose.msra.mxu0 0
    %567 = vmatprep.subr.bf16.mxu0 0
    %568 = vmatpush1.bf16.xpose.msra.mxu0 0
    %569 = vmatprep.subr.bf16.mxu0 0
    %570 = vmatpush1.bf16.xpose.msra.mxu0 0
    %571 = vmatprep.subr.bf16.mxu0 0
    %572 = vmatpush1.bf16.xpose.msra.mxu0 0
    %573 = vmatprep.subr.bf16.mxu0 0
    %574 = vmatpush1.bf16.xpose.msra.mxu0 0
    %575 = vmatprep.subr.bf16.mxu0 0
    %576 = vmatpush1.bf16.xpose.msra.mxu0 0
    %577 = vmatprep.subr.bf16.mxu0 0
    %578 = vmatpush1.bf16.xpose.msra.mxu0 0
    %579 = vmatprep.subr.bf16.mxu0 0
    %580 = vmatpush1.bf16.xpose.msra.mxu0 0
    %581 = vmatprep.subr.bf16.mxu0 0
    %582 = vmatpush1.bf16.xpose.msra.mxu0 0
    %583 = vmatprep.subr.bf16.mxu0 0
    %584 = vmatpush1.bf16.xpose.msra.mxu0 0
    %585 = vmatprep.subr.bf16.mxu0 0
    %586 = vmatpush1.bf16.xpose.msra.mxu0 0
    %587 = vmatprep.subr.bf16.mxu0 0
    %588 = vmatpush1.bf16.xpose.msra.mxu0 0
    %589 = vmatprep.subr.bf16.mxu0 0
    %590 = vmatpush1.bf16.xpose.msra.mxu0 0
    %591 = vmatprep.subr.bf16.mxu0 0
    %592 = vmatpush1.bf16.xpose.msra.mxu0 0
    %593 = vmatprep.subr.bf16.mxu0 0
    %594 = vmatpush1.bf16.xpose.msra.mxu0 0
    %595 = vmatprep.mubr.bf16.mxu0 0
    %596 = vmatmul.mubr.bf16.gmra.mrb[0].mxu0 %v495
    %v597 = vpop.f32.mrb[0].mxu0
    %v598 = vadd.f32 0.0, %v597
    %v599 = vpop.f32.mrb[0].mxu0
    %v600 = vpop.f32.mrb[0].mxu0
    %v601 = vadd.f32 0.0, %v600
    %v602 = vpop.f32.mrb[0].mxu0
    %603 = vdwg.mxu0
    %v604 = vmax.f32 %v557, 0.0
    %v605 = vmax.f32 %v560, 0.0
    %v606 = vmax.f32 %v598, 0.0
    %v607 = vmax.f32 %v601, 0.0
    %v608 = vmul.f32 %v604, %v604
    %v609 = vmul.f32 %v605, %v605
    %v610 = vmul.f32 %v606, %v606
    %v611 = vmul.f32 %v607, %v607
    %v612 = vpack.c.bf16 %v609, %v608
    %v613 = vpack.c.bf16 %v611, %v610
    %vm614 = vcmask 130048
    %v616 = vsel %vm614, %v612, 0
    %618 = vmatprep.subr.bf16.mxu0 0
    %619 = vmatpush1.bf16.msra.mxu0 %v520
    %620 = vmatprep.subr.bf16.mxu0 0
    %621 = vmatpush1.bf16.msra.mxu0 0
    %622 = vmatprep.subr.bf16.mxu0 0
    %623 = vmatpush1.bf16.msra.mxu0 0
    %624 = vmatprep.subr.bf16.mxu0 0
    %625 = vmatpush1.bf16.msra.mxu0 0
    %626 = vmatprep.subr.bf16.mxu0 0
    %627 = vmatpush1.bf16.msra.mxu0 0
    %628 = vmatprep.subr.bf16.mxu0 0
    %629 = vmatpush1.bf16.msra.mxu0 0
    %630 = vmatprep.subr.bf16.mxu0 0
    %631 = vmatpush1.bf16.msra.mxu0 0
    %632 = vmatprep.subr.bf16.mxu0 0
    %633 = vmatpush1.bf16.msra.mxu0 0
    %634 = vmatprep.subr.bf16.mxu0 0
    %635 = vmatpush1.bf16.msra.mxu0 0
    %636 = vmatprep.subr.bf16.mxu0 0
    %637 = vmatpush1.bf16.msra.mxu0 0
    %638 = vmatprep.subr.bf16.mxu0 0
    %639 = vmatpush1.bf16.msra.mxu0 0
    %640 = vmatprep.subr.bf16.mxu0 0
    %641 = vmatpush1.bf16.msra.mxu0 0
    %642 = vmatprep.subr.bf16.mxu0 0
    %643 = vmatpush1.bf16.msra.mxu0 0
    %644 = vmatprep.subr.bf16.mxu0 0
    %645 = vmatpush1.bf16.msra.mxu0 0
    %646 = vmatprep.subr.bf16.mxu0 0
    %647 = vmatpush1.bf16.msra.mxu0 0
    %648 = vmatprep.subr.bf16.mxu0 0
    %649 = vmatpush1.bf16.msra.mxu0 0
    %650 = vmatprep.mubr.bf16.mxu0 0
    %651 = vmatmul.mubr.bf16.gmra.mrb[0].mxu0 %v616
    %v652 = vpop.f32.mrb[0].mxu0
    %v653 = vadd.f32 0.0, %v652
    %v654 = vpop.f32.mrb[0].mxu0
    %v655 = vpop.f32.mrb[0].mxu0
    %v656 = vadd.f32 0.0, %v655
    %v657 = vpop.f32.mrb[0].mxu0
    %658 = vdwg.mxu0
    %v660 = vsel %vm614, %v613, 0
    %662 = vmatprep.subr.bf16.mxu0 0
    %663 = vmatpush1.bf16.msra.mxu0 %v521
    %664 = vmatprep.subr.bf16.mxu0 0
    %665 = vmatpush1.bf16.msra.mxu0 0
    %666 = vmatprep.subr.bf16.mxu0 0
    %667 = vmatpush1.bf16.msra.mxu0 0
    %668 = vmatprep.subr.bf16.mxu0 0
    %669 = vmatpush1.bf16.msra.mxu0 0
    %670 = vmatprep.subr.bf16.mxu0 0
    %671 = vmatpush1.bf16.msra.mxu0 0
    %672 = vmatprep.subr.bf16.mxu0 0
    %673 = vmatpush1.bf16.msra.mxu0 0
    %674 = vmatprep.subr.bf16.mxu0 0
    %675 = vmatpush1.bf16.msra.mxu0 0
    %676 = vmatprep.subr.bf16.mxu0 0
    %677 = vmatpush1.bf16.msra.mxu0 0
    %678 = vmatprep.subr.bf16.mxu0 0
    %679 = vmatpush1.bf16.msra.mxu0 0
    %680 = vmatprep.subr.bf16.mxu0 0
    %681 = vmatpush1.bf16.msra.mxu0 0
    %682 = vmatprep.subr.bf16.mxu0 0
    %683 = vmatpush1.bf16.msra.mxu0 0
    %684 = vmatprep.subr.bf16.mxu0 0
    %685 = vmatpush1.bf16.msra.mxu0 0
    %686 = vmatprep.subr.bf16.mxu0 0
    %687 = vmatpush1.bf16.msra.mxu0 0
    %688 = vmatprep.subr.bf16.mxu0 0
    %689 = vmatpush1.bf16.msra.mxu0 0
    %690 = vmatprep.subr.bf16.mxu0 0
    %691 = vmatpush1.bf16.msra.mxu0 0
    %692 = vmatprep.subr.bf16.mxu0 0
    %693 = vmatpush1.bf16.msra.mxu0 0
    %694 = vmatprep.mubr.bf16.mxu0 0
    %695 = vmatmul.mubr.bf16.gmra.mrb[0].mxu0 %v660
    %v696 = vpop.f32.mrb[0].mxu0
    %v697 = vadd.f32 0.0, %v696
    %v698 = vpop.f32.mrb[0].mxu0
    %v699 = vpop.f32.mrb[0].mxu0
    %v700 = vadd.f32 0.0, %v699
    %v701 = vpop.f32.mrb[0].mxu0
    %702 = vdwg.mxu0
    %v703 = vmul.f32 %v653, %v364
    %v704 = vmul.f32 %v656, %v365
    %v705 = vmul.f32 %v697, %v366
    %v706 = vmul.f32 %v700, %v367
    %v707 = vpack.c.bf16 %v704, %v703
    %v708 = vpack.c.bf16 %v706, %v705
    %v709 = vld [vmem:[%s13] sm:$0xf]
    %v710 = vld [vmem:[%s13 + $0x4] sm:$0xf]
    %v711 = vld [vmem:[%s13 + $0x8] sm:$0xf]
    %v712 = vld [vmem:[%s13 + $0xc] sm:$0xf]
    %v713 = vld [vmem:[%s13 + $0x10] sm:$0xf]
    %v714 = vld [vmem:[%s13 + $0x14] sm:$0xf]
    %v715 = vld [vmem:[%s13 + $0x18] sm:$0xf]
    %v716 = vld [vmem:[%s13 + $0x1c] sm:$0xf]
    %v717 = vld [vmem:[%s14] sm:$0x1]
    %v719 = vlaneseq
    %v720 = vshrl.u32 %v719, 7
    %v721 = vsub.s32 0, %v720
    %v722 = vrot.slane %v717, %v721
    %v732 = vunpack.c.l.b16 %v709
    %v733 = vunpack.c.l.b16 %v710
    %v734 = vunpack.c.l.b16 %v711
    %v735 = vunpack.c.l.b16 %v712
    %v736 = vunpack.c.l.b16 %v713
    %v737 = vunpack.c.l.b16 %v714
    %v738 = vunpack.c.l.b16 %v715
    %v739 = vunpack.c.l.b16 %v716
    %v740 = vpack.c.b16 %v733, %v732
    %v741 = vpack.c.b16 %v735, %v734
    %v742 = vpack.c.b16 %v737, %v736
    %v743 = vpack.c.b16 %v739, %v738
    %vm748 = vcmask 523264
    %v750 = vsel %vm748, %v707, 0
    %v753 = vsel %vm748, %v708, 0
    %755 = vmatprep.subr.bf16.mxu0 0
    %756 = vmatpush1.bf16.msra.mxu0 %v740
    %757 = vmatprep.subr.bf16.mxu0 0
    %758 = vmatpush1.bf16.msra.mxu0 %v741
    %759 = vmatprep.subr.bf16.mxu0 0
    %760 = vmatpush1.bf16.msra.mxu0 %v742
    %761 = vmatprep.subr.bf16.mxu0 0
    %762 = vmatpush1.bf16.msra.mxu0 %v743
    %763 = vmatprep.subr.bf16.mxu0 0
    %764 = vmatpush1.bf16.msra.mxu0 0
    %765 = vmatprep.subr.bf16.mxu0 0
    %766 = vmatpush1.bf16.msra.mxu0 0
    %767 = vmatprep.subr.bf16.mxu0 0
    %768 = vmatpush1.bf16.msra.mxu0 0
    %769 = vmatprep.subr.bf16.mxu0 0
    %770 = vmatpush1.bf16.msra.mxu0 0
    %771 = vmatprep.subr.bf16.mxu0 0
    %772 = vmatpush1.bf16.msra.mxu0 0
    %773 = vmatprep.subr.bf16.mxu0 0
    %774 = vmatpush1.bf16.msra.mxu0 0
    %775 = vmatprep.subr.bf16.mxu0 0
    %776 = vmatpush1.bf16.msra.mxu0 0
    %777 = vmatprep.subr.bf16.mxu0 0
    %778 = vmatpush1.bf16.msra.mxu0 0
    %779 = vmatprep.subr.bf16.mxu0 0
    %780 = vmatpush1.bf16.msra.mxu0 0
    %781 = vmatprep.subr.bf16.mxu0 0
    %782 = vmatpush1.bf16.msra.mxu0 0
    %783 = vmatprep.subr.bf16.mxu0 0
    %784 = vmatpush1.bf16.msra.mxu0 0
    %785 = vmatprep.subr.bf16.mxu0 0
    %786 = vmatpush1.bf16.msra.mxu0 0
    %787 = vmatprep.mubr.bf16.mxu0 0
    %788 = vmatmul.mubr.bf16.gmra.mrb[0].mxu0 %v750
    %v789 = vpop.f32.mrb[0].mxu0
    %v790 = vadd.f32 %v722, %v789
    %v791 = vpop.f32.mrb[0].mxu0
    %v792 = vpop.f32.mrb[0].mxu0
    %v793 = vadd.f32 %v722, %v792
    %v794 = vpop.f32.mrb[0].mxu0
    %795 = vmatprep.mubr.bf16.mxu0 0
    %796 = vmatmul.mubr.bf16.gmra.mrb[0].mxu0 %v753
    %v797 = vpop.f32.mrb[0].mxu0
    %v798 = vadd.f32 %v722, %v797
    %v799 = vpop.f32.mrb[0].mxu0
    %v800 = vpop.f32.mrb[0].mxu0
    %v801 = vadd.f32 %v722, %v800
    %v802 = vpop.f32.mrb[0].mxu0
    %803 = vdwg.mxu0
    %v804 = vadd.f32 %v790, %v80
    %v805 = vadd.f32 %v793, %v81
    %v806 = vadd.f32 %v798, %v82
    %v807 = vadd.f32 %v801, %v83
    %808 = vst.msk [vmem:[#allocation7] sm:$0xff] %vm84, %v804
    %809 = vst.msk [vmem:[#allocation7 + $0x8] sm:$0xff] %vm84, %v805
    %810 = vst.msk [vmem:[#allocation7 + $0x10] sm:$0xff] %vm84, %v806
    %811 = vst.msk [vmem:[#allocation7 + $0x18] sm:$0xff] %vm84, %v807
    // Predicated region
    $region70: #{tpu_custom_call.1} parent=1 // pred_check
      _
    $region71: #{tpu_custom_call.1} parent=1 // pred_check_branch
      %813 = sbr.rel (0) target = $region73
    $region72: #{tpu_custom_call.1} parent=1 // pred_region
      %s815 = ssub.s32 512, 512
      %816 = vsyncadd [#allocation4], %s815
      %s817 = sshll.u32 [#allocation7], 4
      %s818 = int_to_ptr.vmem [resolvable:$true] %s817
      %823 = dma.vmem_to_hbm [thread:$0]  %s818, 512, %s15, [#allocation4], 128, 128, 8
    $region73: #{tpu_custom_call.1} parent=1 // pred_fallthru
      _
    // Predicated region
    $region74: #{tpu_custom_call.1} parent=1 // pred_check
      _
    $region75: #{tpu_custom_call.1} parent=1 // pred_check_branch
      %825 = sbr.rel (0) target = $region77
    $region76: #{tpu_custom_call.1} parent=1 // pred_region
      %826 = dma.done [#allocation4], 512
    $region77: #{tpu_custom_call.1} parent=1 // pred_fallthru
      _
    %827 = vsyncpa [#allocation3], 1
    %828 = vsyncpa [#allocation6], 1
    %829 = vsyncpa [#allocation4], 1

</llo_original>
